<compile_context>
chip_gen: v7x
topology: tpu7x:2x2x1
jax: 0.10.0
libtpu: 0.0.40
codegen_flags: <defaults>
</compile_context>

<pallas_src>
import jax
import jax.numpy as jnp
from jax.experimental import pallas as pl
from jax.experimental.pallas import tpu as pltpu
import numpy as np


def _decode_kernel(x_ref, gt_ref, out_ref):
    # x_ref  : (D, T) f32   cepstral values at the D delay bins, lane-dense
    #                       over flattened batch*windows
    # gt_ref : (1, T) i32   ground-truth class index per window
    # out_ref: (1, T) f32   1.0 where decoded class == ground truth else 0.0
    num_delays = x_ref.shape[0]

    # Unrolled hard argmax over the (static, tiny) delay axis.
    best = x_ref[pl.ds(0, 1), :]                         # (1, T)
    idx = jnp.zeros(best.shape, dtype=jnp.int32)
    for d in range(1, num_delays):
        row = x_ref[pl.ds(d, 1), :]
        take = row > best
        best = jnp.where(take, row, best)
        idx = jnp.where(take, jnp.int32(d), idx)

    out_ref[...] = (idx == gt_ref[...]).astype(jnp.float32)


def _round_up(v, m):
    return (v + m - 1) // m * m


def cepstral_domain_decoding_loss(cepstrum_batch, gt_symbols_batch,
                                  num_errs_no_reverb_batch,
                                  num_errs_reverb_batch,
                                  *, delays, win_size,
                                  softargmax_beta=1e10, lane_tile=2048):
    # softargmax_beta kept for API parity; with beta ~ 1e10 the softargmax is
    # a hard argmax, which is what the kernel computes directly.
    del softargmax_beta
    B, _, w2, num_wins = cepstrum_batch.shape
    assert w2 == win_size // 2
    delays = tuple(int(d) for d in delays)
    D = len(delays)
    N = B * num_wins

    # One XLA gather of the delay rows of channel 0, then lane-dense layout:
    # delays on sublanes, batch*windows on lanes.
    x = jnp.take(cepstrum_batch[:, 0], jnp.asarray(delays), axis=1)  # (B,D,W)
    x = jnp.transpose(x.astype(jnp.float32), (1, 0, 2)).reshape(D, N)
    gt = gt_symbols_batch.reshape(1, N).astype(jnp.int32)

    # Lane tiling: pad the flattened window axis to a multiple of the tile.
    tile = min(int(lane_tile), _round_up(N, 128))
    n_pad = _round_up(N, tile)
    if n_pad != N:
        x = jnp.pad(x, ((0, 0), (0, n_pad - N)))
        gt = jnp.pad(gt, ((0, 0), (0, n_pad - N)), constant_values=-1)
    grid = (n_pad // tile,)

    cost = pl.CostEstimate(
        flops=3 * D * n_pad,
        transcendentals=0,
        bytes_accessed=(D * n_pad) * 4 + n_pad * 4 + n_pad * 4)

    correct_pad = pl.pallas_call(
        _decode_kernel,
        out_shape=jax.ShapeDtypeStruct((1, n_pad), jnp.float32),
        grid_spec=pltpu.PrefetchScalarGridSpec(
            num_scalar_prefetch=0,
            grid=grid,
            in_specs=[
                pl.BlockSpec((D, tile), lambda i: (0, i)),
                pl.BlockSpec((1, tile), lambda i: (0, i)),
            ],
            out_specs=pl.BlockSpec((1, tile), lambda i: (0, i)),
        ),
        compiler_params=pltpu.CompilerParams(
            dimension_semantics=("parallel",)),
        cost_estimate=cost,
    )(x, gt)

    # --- tiny O(B) epilogue in plain JAX ---
    correct = correct_pad[0, :N]                             # (N,)
    num_correct_per_samp = correct.reshape(B, num_wins).sum(axis=-1)

    total = float(N)
    nerr_nr = num_errs_no_reverb_batch.astype(jnp.float32)
    nerr_r = num_errs_reverb_batch.astype(jnp.float32)

    sym_err_rate = 1.0 - jnp.sum(correct) / total
    num_err_per_samp = float(num_wins) - num_correct_per_samp
    avg_err_reduction_loss = jnp.mean(
        jnp.maximum(num_err_per_samp, 0.0) / jnp.maximum(nerr_r, 1.0))
    no_reverb_sym_err_rate = jnp.sum(nerr_nr) / total
    reverb_sym_err_rate = jnp.sum(nerr_r) / total

    return (sym_err_rate, avg_err_reduction_loss,
            no_reverb_sym_err_rate, reverb_sym_err_rate)


def _reference(cepstrum_batch, gt, nerr_nr, nerr_r, *, delays, win_size, beta):
    # Pure-JAX mirror of the PyTorch forward (softargmax with huge beta).
    B, _, w2, num_wins = cepstrum_batch.shape
    x = jnp.transpose(cepstrum_batch[:, 0], (0, 2, 1)).reshape(-1, w2)
    cv = x[:, jnp.asarray(delays)]
    p = jax.nn.softmax(cv * beta, axis=-1)
    pred = jnp.sum(p * jnp.arange(len(delays), dtype=jnp.float32), axis=-1)
    decoded = jnp.floor(pred + 0.5)       # class index the softargmax encodes
    correct = (decoded == gt.reshape(-1).astype(jnp.float32)).astype(jnp.float32)
    ser = 1.0 - jnp.mean(correct)
    errs_per_samp = num_wins - correct.reshape(B, num_wins).sum(-1)
    avg = jnp.mean(jnp.maximum(errs_per_samp, 0.0) /
                   jnp.maximum(nerr_r.astype(jnp.float32), 1.0))
    tot = B * num_wins
    return ser, avg, jnp.sum(nerr_nr) / tot, jnp.sum(nerr_r) / tot


if __name__ == "__main__":
    # module config (deterministic, in-script)
    win_size = 128                     # -> one-sided cepstrum length 64
    delays = [4, 9, 17, 33, 41, 50]    # cepstral delay bins (num classes = 6)
    num_wins = 8
    batch = 2
    beta = 1e10

    key = jax.random.PRNGKey(0)
    k1, k2, k3, k4 = jax.random.split(key, 4)
    cepstrum_batch = jax.random.normal(
        k1, (batch, 2, win_size // 2, num_wins), jnp.float32)
    gt_symbols_batch = jax.random.randint(
        k2, (batch, num_wins), 0, len(delays)).astype(jnp.int32)
    num_errs_no_reverb_batch = jax.random.randint(
        k3, (batch,), 0, num_wins).astype(jnp.float32)
    num_errs_reverb_batch = jax.random.randint(
        k4, (batch,), 0, num_wins).astype(jnp.float32)

    outs = cepstral_domain_decoding_loss(
        cepstrum_batch, gt_symbols_batch,
        num_errs_no_reverb_batch, num_errs_reverb_batch,
        delays=delays, win_size=win_size, softargmax_beta=beta)
    outs = jax.block_until_ready(outs)

    refs = _reference(cepstrum_batch, gt_symbols_batch,
                      num_errs_no_reverb_batch, num_errs_reverb_batch,
                      delays=delays, win_size=win_size, beta=beta)
    for o, r in zip(outs, refs):
        np.testing.assert_allclose(np.asarray(o), np.asarray(r),
                                   rtol=1e-6, atol=1e-6)

    print("KERNEL_OK")
</pallas_src>

<mosaic_0001>
module attributes {stable_mosaic.version = 11 : i64} {
  func.func @_decode_kernel(%arg0: i32, %arg1: memref<6x128xf32, #tpu.memory_space<vmem>>, %arg2: memref<1x128xi32, #tpu.memory_space<vmem>>, %arg3: memref<1x128xf32, #tpu.memory_space<vmem>>) attributes {dimension_semantics = [#tpu.dimension_semantics<parallel>], iteration_bounds = array<i64: 1>, scalar_prefetch = 0 : i64, scratch_operands = 0 : i64, tpu.core_type = #tpu.core_type<tc>, window_params = [{transform_indices = @transform_0, window_bounds = array<i64: 6, 128>}, {transform_indices = @transform_1, window_bounds = array<i64: 1, 128>}, {transform_indices = @transform_2, window_bounds = array<i64: 1, 128>}]} {
    %c0 = arith.constant 0 : index
    %c0_0 = arith.constant 0 : index
    %0 = vector.load %arg1[%c0, %c0_0] : memref<6x128xf32, #tpu.memory_space<vmem>>, vector<1x128xf32>
    %c0_i32 = arith.constant 0 : i32
    %1 = vector.broadcast %c0_i32 : i32 to vector<1x128xi32>
    %c1 = arith.constant 1 : index
    %c0_1 = arith.constant 0 : index
    %2 = vector.load %arg1[%c1, %c0_1] : memref<6x128xf32, #tpu.memory_space<vmem>>, vector<1x128xf32>
    %3 = arith.cmpf ogt, %2, %0 : vector<1x128xf32>
    %4 = arith.select %3, %2, %0 : vector<1x128xi1>, vector<1x128xf32>
    %c1_i32 = arith.constant 1 : i32
    %5 = vector.broadcast %c1_i32 : i32 to vector<1x128xi32>
    %6 = arith.select %3, %5, %1 : vector<1x128xi1>, vector<1x128xi32>
    %c2 = arith.constant 2 : index
    %c0_2 = arith.constant 0 : index
    %7 = vector.load %arg1[%c2, %c0_2] : memref<6x128xf32, #tpu.memory_space<vmem>>, vector<1x128xf32>
    %8 = arith.cmpf ogt, %7, %4 : vector<1x128xf32>
    %9 = arith.select %8, %7, %4 : vector<1x128xi1>, vector<1x128xf32>
    %c2_i32 = arith.constant 2 : i32
    %10 = vector.broadcast %c2_i32 : i32 to vector<1x128xi32>
    %11 = arith.select %8, %10, %6 : vector<1x128xi1>, vector<1x128xi32>
    %c3 = arith.constant 3 : index
    %c0_3 = arith.constant 0 : index
    %12 = vector.load %arg1[%c3, %c0_3] : memref<6x128xf32, #tpu.memory_space<vmem>>, vector<1x128xf32>
    %13 = arith.cmpf ogt, %12, %9 : vector<1x128xf32>
    %14 = arith.select %13, %12, %9 : vector<1x128xi1>, vector<1x128xf32>
    %c3_i32 = arith.constant 3 : i32
    %15 = vector.broadcast %c3_i32 : i32 to vector<1x128xi32>
    %16 = arith.select %13, %15, %11 : vector<1x128xi1>, vector<1x128xi32>
    %c4 = arith.constant 4 : index
    %c0_4 = arith.constant 0 : index
    %17 = vector.load %arg1[%c4, %c0_4] : memref<6x128xf32, #tpu.memory_space<vmem>>, vector<1x128xf32>
    %18 = arith.cmpf ogt, %17, %14 : vector<1x128xf32>
    %19 = arith.select %18, %17, %14 : vector<1x128xi1>, vector<1x128xf32>
    %c4_i32 = arith.constant 4 : i32
    %20 = vector.broadcast %c4_i32 : i32 to vector<1x128xi32>
    %21 = arith.select %18, %20, %16 : vector<1x128xi1>, vector<1x128xi32>
    %c5 = arith.constant 5 : index
    %c0_5 = arith.constant 0 : index
    %22 = vector.load %arg1[%c5, %c0_5] : memref<6x128xf32, #tpu.memory_space<vmem>>, vector<1x128xf32>
    %23 = arith.cmpf ogt, %22, %19 : vector<1x128xf32>
    %c5_i32 = arith.constant 5 : i32
    %24 = vector.broadcast %c5_i32 : i32 to vector<1x128xi32>
    %25 = arith.select %23, %24, %21 : vector<1x128xi1>, vector<1x128xi32>
    %c0_6 = arith.constant 0 : index
    %c0_7 = arith.constant 0 : index
    %26 = vector.load %arg2[%c0_6, %c0_7] : memref<1x128xi32, #tpu.memory_space<vmem>>, vector<1x128xi32>
    %27 = arith.cmpi eq, %25, %26 : vector<1x128xi32>
    %28 = arith.extui %27 : vector<1x128xi1> to vector<1x128xi32>
    %29 = arith.sitofp %28 : vector<1x128xi32> to vector<1x128xf32>
    %c0_8 = arith.constant 0 : index
    %c0_9 = arith.constant 0 : index
    %30 = vector.load %arg3[%c0_8, %c0_9] : memref<1x128xf32, #tpu.memory_space<vmem>>, vector<1x128xf32>
    tpu.vector_store %arg3[%c0_8, %c0_9], %29 {strides = array<i32>} : memref<1x128xf32, #tpu.memory_space<vmem>>, vector<1x128xf32>,
    return
  }
  func.func @transform_0(%arg0: i32) -> (i32, i32) {
    %c0_i32 = arith.constant 0 : i32
    %c0_i32_0 = arith.constant 0 : i32
    return %c0_i32, %arg0 : i32, i32
  }
  func.func @transform_1(%arg0: i32) -> (i32, i32) {
    %c0_i32 = arith.constant 0 : i32
    %c0_i32_0 = arith.constant 0 : i32
    return %c0_i32, %arg0 : i32, i32
  }
  func.func @transform_2(%arg0: i32) -> (i32, i32) {
    %c0_i32 = arith.constant 0 : i32
    %c0_i32_0 = arith.constant 0 : i32
    return %c0_i32, %arg0 : i32, i32
  }
}

</mosaic_0001>

<llo_original>
// kernel: tpu_custom_call.1
$region0: #{tpu_custom_call.1}
  #allocation0 [shape = 'u32[]', space=smem, size = 0x4, offset = 0x4, fixed_abs, tag = 'smem constant byte address 0x4 - core index']
  #allocation1 [shape = 'u32[144,128]{1,0:T(1,128)}', space=vmem, size = 0x12000, scoped, tag = 'internal scratch']
  %s0 = inlined_call_operand.hbm [shape: f32[6,128], index: 0, kind: input, shape index: {}]
  %s1 = inlined_call_operand.vmem [shape: s32[1,128], index: 1, kind: input, shape index: {}]
  %s2 = inlined_call_operand.hbm [shape: f32[1,128], index: 2, kind: output, shape index: {}]
  %s3 = sld [smem:[#allocation0]]
  $region22: #{tpu_custom_call.1} parent=0
    _
  %s5 = ssub.s32 1, %s3
  %s6 = scalar_select 0, %s5, %s3
  $region1: #{tpu_custom_call.1} parent=0
    #allocation2 [shape = 'u8[4096]{0}', space=vmem, size = 0x1000, scoped, tag = 'input window, operand 0, single buffered']
    #allocation3 [shape = 's32[1]{0}', space=sflag, size = 0x4, scoped, tag = 'scoped memory for tpu_custom_call.1']
    #allocation4 [shape = 's32[1]{0}', space=sflag, size = 0x4, scoped, tag = 'scoped memory for tpu_custom_call.1']
    #allocation5 [shape = 'u8[512]{0}', space=vmem, size = 0x400, scoped, tag = 'output window, operand 0, single buffered']
    %7 = vsyncpa [#allocation3], 0
    %8 = vsyncpa [#allocation4], 0
    // Predicated region
    $region2: #{tpu_custom_call.1} parent=1 // pred_check
      _
    $region3: #{tpu_custom_call.1} parent=1 // pred_check_branch
      %10 = sbr.rel (0) target = $region5
    $region4: #{tpu_custom_call.1} parent=1 // pred_region
      %s12 = ssub.s32 128, 128
      %13 = vsyncadd [#allocation3], %s12
      %s15 = sshll.u32 [#allocation2], 4
      %s16 = int_to_ptr.vmem [resolvable:$true] %s15
      %18 = dma.hbm_to_vmem [thread:$0]  %s0, 128, %s16, [#allocation3]
    $region5: #{tpu_custom_call.1} parent=1 // pred_fallthru
      _
    // Predicated region
    $region6: #{tpu_custom_call.1} parent=1 // pred_check
      _
    $region7: #{tpu_custom_call.1} parent=1 // pred_check_branch
      %20 = sbr.rel (0) target = $region9
    $region8: #{tpu_custom_call.1} parent=1 // pred_region
      _
    $region9: #{tpu_custom_call.1} parent=1 // pred_fallthru
      _
    // Predicated region
    $region10: #{tpu_custom_call.1} parent=1 // pred_check
      _
    $region11: #{tpu_custom_call.1} parent=1 // pred_check_branch
      %22 = sbr.rel (0) target = $region13
    $region12: #{tpu_custom_call.1} parent=1 // pred_region
      %23 = dma.done [#allocation3], 128
    $region13: #{tpu_custom_call.1} parent=1 // pred_fallthru
      _
    %v24 = vld [vmem:[#allocation2] sm:$0x1]
    %v25 = vld [vmem:[#allocation2 + $0x1] sm:$0x1]
    %vm26 = vcmp.gt.f32.partialorder %v25, %v24
    %v27 = vsel %vm26, %v25, %v24
    %v28 = vsel %vm26, 1, 0
    %v29 = vld [vmem:[#allocation2 + $0x2] sm:$0x1]
    %vm30 = vcmp.gt.f32.partialorder %v29, %v27
    %v31 = vsel %vm30, %v29, %v27
    %v32 = vsel %vm30, 2, %v28
    %v33 = vld [vmem:[#allocation2 + $0x3] sm:$0x1]
    %vm34 = vcmp.gt.f32.partialorder %v33, %v31
    %v35 = vsel %vm34, %v33, %v31
    %v36 = vsel %vm34, 3, %v32
    %v37 = vld [vmem:[#allocation2 + $0x4] sm:$0x1]
    %vm38 = vcmp.gt.f32.partialorder %v37, %v35
    %v39 = vsel %vm38, %v37, %v35
    %v40 = vsel %vm38, 4, %v36
    %v41 = vld [vmem:[#allocation2 + $0x5] sm:$0x1]
    %vm42 = vcmp.gt.f32.partialorder %v41, %v39
    %v43 = vsel %vm42, 5, %v40
    %v44 = vld [vmem:[%s1] sm:$0x1]
    %vm45 = vcmp.eq.s32.totalorder %v43, %v44
    %v46 = vsel %vm45, 1, 0
    %v47 = vcvt.s32.f32 %v46
    %48 = vst [vmem:[#allocation5] sm:$0x1] %v47
    // Predicated region
    $region14: #{tpu_custom_call.1} parent=1 // pred_check
      _
    $region15: #{tpu_custom_call.1} parent=1 // pred_check_branch
      %50 = sbr.rel (0) target = $region17
    $region16: #{tpu_custom_call.1} parent=1 // pred_region
      %s52 = ssub.s32 16, 16
      %53 = vsyncadd [#allocation4], %s52
      %s55 = sshll.u32 [#allocation5], 4
      %s56 = int_to_ptr.vmem [resolvable:$true] %s55
      %58 = dma.vmem_to_hbm [thread:$0]  %s56, 16, %s2, [#allocation4]
    $region17: #{tpu_custom_call.1} parent=1 // pred_fallthru
      _
    // Predicated region
    $region18: #{tpu_custom_call.1} parent=1 // pred_check
      _
    $region19: #{tpu_custom_call.1} parent=1 // pred_check_branch
      %60 = sbr.rel (0) target = $region21
    $region20: #{tpu_custom_call.1} parent=1 // pred_region
      %61 = dma.done [#allocation4], 16
    $region21: #{tpu_custom_call.1} parent=1 // pred_fallthru
      _
    %62 = vsyncpa [#allocation3], 1
    %63 = vsyncpa [#allocation4], 1

</llo_original>
